<compile_context>
chip_gen: v5e
topology: v5e:2x2
jax: 0.10.0
libtpu: 0.0.40
codegen_flags: <defaults>
</compile_context>

<pallas_src>
import jax
import jax.numpy as jnp
import numpy as np
from jax.experimental import pallas as pl
from jax.experimental.pallas import tpu as pltpu


POWERS = [2, 3]

# Lane-dense layout: batch lives on the 128-lane axis (always a multiple of
# 128 -> unmasked full-vreg vst), rows grow up to MAX_BLOCK_ROWS per block.
BLOCK_LANES = 512
MAX_BLOCK_ROWS = 1024          # (1024, 512) f32 = 2 MiB per block buffer


def makefeatures(inputs: jnp.ndarray, powers) -> jnp.ndarray:
    """Plain-JAX port of the reference makefeatures (used only for checking)."""
    cols = [inputs.astype(jnp.float32) ** p for p in powers]
    return jnp.stack(cols, axis=1)  # (N, len(powers))


def _make_poly_linear_kernel(powers):
    """Fused kernel: out = b + sum_i w[i] * t**powers[i], Horner form, pure VPU."""
    powers = tuple(int(p) for p in powers)
    order = sorted(range(len(powers)), key=lambda i: powers[i])
    sorted_pows = [powers[i] for i in order]

    def kernel(w_ref, b_ref, t_ref, o_ref):
        # w_ref: SMEM (len(powers),)   b_ref: SMEM (1,)
        # t_ref / o_ref: (block_rows, BLOCK_LANES) VMEM, batch on the lane axis.
        t = t_ref[...]

        def t_pow(e):  # trace-time small-integer exponent
            if e == 0:
                return jnp.ones_like(t)
            r = t
            for _ in range(e - 1):
                r = r * t
            return r

        # Horner over ascending powers:
        #   out = b + t^p0 * (w_{p0} + t^(p1-p0) * (w_{p1} + ...))
        acc = jnp.full_like(t, w_ref[order[-1]])
        for k in range(len(sorted_pows) - 2, -1, -1):
            delta = sorted_pows[k + 1] - sorted_pows[k]
            acc = acc * t_pow(delta) + w_ref[order[k]]
        o_ref[...] = acc * t_pow(sorted_pows[0]) + b_ref[0]

    return kernel


def linear_model_forward(inputs: jnp.ndarray,
                         weight: jnp.ndarray,
                         bias: jnp.ndarray,
                         powers=POWERS,
                         max_block_rows: int = MAX_BLOCK_ROWS) -> jnp.ndarray:
    """Fused forward: polynomial features + Linear(len(powers), 1).

    inputs: (N,) float32   raw regressor (feature construction is fused)
    weight: (1, len(powers)) float32   (PyTorch Linear layout: (out, in))
    bias:   (1,) float32
    returns (N, 1) float32
    """
    n = int(inputs.shape[0])
    x = inputs.astype(jnp.float32)

    # Pad only to the lane width (<=511 extra elements).  When n is already a
    # multiple of BLOCK_LANES the reshape below is a free bitcast -- no extra
    # HBM pass over the whole array.
    n_pad = ((n + BLOCK_LANES - 1) // BLOCK_LANES) * BLOCK_LANES
    if n_pad != n:
        x = jnp.pad(x, (0, n_pad - n))
    rows = n_pad // BLOCK_LANES
    t2d = x.reshape(rows, BLOCK_LANES)

    # Block rows: as large as possible (amortize per-step overhead), multiple
    # of 8 for the (8, 128) tiling rule; the ragged last block (rows not a
    # multiple of block_rows) is handled by Pallas block padding/masked store.
    block_rows = min(int(max_block_rows), ((rows + 7) // 8) * 8)
    grid = (pl.cdiv(rows, block_rows),)

    w = weight.reshape(-1).astype(jnp.float32)   # (len(powers),) scalars in SMEM
    b = bias.reshape(-1).astype(jnp.float32)     # (1,) scalar in SMEM

    n_elems = rows * BLOCK_LANES
    cost = pl.CostEstimate(flops=5 * n_elems,
                           transcendentals=0,
                           bytes_accessed=8 * n_elems)   # 4B read + 4B write

    out2d = pl.pallas_call(
        _make_poly_linear_kernel(powers),
        out_shape=jax.ShapeDtypeStruct((rows, BLOCK_LANES), jnp.float32),
        grid=grid,
        in_specs=[
            pl.BlockSpec(memory_space=pltpu.MemorySpace.SMEM),   # weight scalars
            pl.BlockSpec(memory_space=pltpu.MemorySpace.SMEM),   # bias scalar
            pl.BlockSpec((block_rows, BLOCK_LANES), lambda i: (i, 0)),
        ],
        out_specs=pl.BlockSpec((block_rows, BLOCK_LANES), lambda i: (i, 0)),
        compiler_params=pltpu.CompilerParams(
            dimension_semantics=("parallel",)),
        cost_estimate=cost,
    )(w, b, t2d)

    # Back to the PyTorch (N, 1) column layout (free when n == n_pad).
    return out2d.reshape(n_pad)[:n].reshape(n, 1)


if __name__ == "__main__":
    key = jax.random.PRNGKey(0)
    k_in, k_w, k_b, k_in2 = jax.random.split(key, 4)

    fan_in = len(POWERS)
    bound = 1.0 / np.sqrt(fan_in)
    weight = jax.random.uniform(k_w, (1, fan_in), dtype=jnp.float32,
                                minval=-bound, maxval=bound)
    bias = jax.random.uniform(k_b, (1,), dtype=jnp.float32,
                              minval=-bound, maxval=bound)

    # Case 1: small batch matching the original spec scale (N = 8),
    # exercises the ragged (partial) block path.
    N1 = 8
    inputs1 = jax.random.uniform(k_in, (N1,), dtype=jnp.float32,
                                 minval=-1.0, maxval=1.0)
    out1 = jax.block_until_ready(linear_model_forward(inputs1, weight, bias))
    ref1 = makefeatures(inputs1, POWERS) @ weight.T + bias.reshape(1, 1)
    assert out1.shape == (N1, 1)
    np.testing.assert_allclose(np.asarray(out1), np.asarray(ref1),
                               rtol=1e-5, atol=1e-5)

    # Case 2: batch with tail padding (N not a multiple of BLOCK_LANES).
    N2 = 5000
    inputs2 = jax.random.uniform(k_in2, (N2,), dtype=jnp.float32,
                                 minval=-2.0, maxval=2.0)
    out2 = jax.block_until_ready(linear_model_forward(inputs2, weight, bias))
    ref2 = makefeatures(inputs2, POWERS) @ weight.T + bias.reshape(1, 1)
    assert out2.shape == (N2, 1)
    np.testing.assert_allclose(np.asarray(out2), np.asarray(ref2),
                               rtol=1e-5, atol=1e-5)

    # Case 3: force a multi-block grid (grid > 1) plus a ragged last block by
    # shrinking the block, to exercise the pipelined path at small N.
    out3 = jax.block_until_ready(
        linear_model_forward(inputs2, weight, bias, max_block_rows=8))
    np.testing.assert_allclose(np.asarray(out3), np.asarray(ref2),
                               rtol=1e-5, atol=1e-5)

    print("KERNEL_OK")
</pallas_src>

<mosaic_0001>
module attributes {stable_mosaic.version = 11 : i64} {
  func.func @kernel(%arg0: i32, %arg1: memref<2xf32, #tpu.memory_space<smem>>, %arg2: memref<1xf32, #tpu.memory_space<smem>>, %arg3: memref<8x512xf32, #tpu.memory_space<vmem>>, %arg4: memref<8x512xf32, #tpu.memory_space<vmem>>) attributes {dimension_semantics = [#tpu.dimension_semantics<parallel>], iteration_bounds = array<i64: 1>, scalar_prefetch = 0 : i64, scratch_operands = 0 : i64, tpu.core_type = #tpu.core_type<tc>, window_params = [{transform_indices = @transform_0, window_bounds = array<i64: 2>}, {transform_indices = @transform_1, window_bounds = array<i64: 1>}, {transform_indices = @transform_2, window_bounds = array<i64: 8, 512>}, {transform_indices = @transform_3, window_bounds = array<i64: 8, 512>}]} {
    %c0 = arith.constant 0 : index
    %c0_0 = arith.constant 0 : index
    %0 = vector.load %arg3[%c0, %c0_0] : memref<8x512xf32, #tpu.memory_space<vmem>>, vector<8x512xf32>
    %c1 = arith.constant 1 : index
    %1 = memref.load %arg1[%c1] : memref<2xf32, #tpu.memory_space<smem>>
    %2 = vector.broadcast %1 : f32 to vector<8x512xf32>
    %3 = arith.mulf %2, %0 : vector<8x512xf32>
    %c0_1 = arith.constant 0 : index
    %4 = memref.load %arg1[%c0_1] : memref<2xf32, #tpu.memory_space<smem>>
    %5 = vector.broadcast %4 : f32 to vector<8x512xf32>
    %6 = arith.addf %3, %5 : vector<8x512xf32>
    %7 = arith.mulf %0, %0 : vector<8x512xf32>
    %8 = arith.mulf %6, %7 : vector<8x512xf32>
    %c0_2 = arith.constant 0 : index
    %9 = memref.load %arg2[%c0_2] : memref<1xf32, #tpu.memory_space<smem>>
    %10 = vector.broadcast %9 : f32 to vector<8x512xf32>
    %11 = arith.addf %8, %10 : vector<8x512xf32>
    %c0_3 = arith.constant 0 : index
    %c0_4 = arith.constant 0 : index
    %12 = vector.load %arg4[%c0_3, %c0_4] : memref<8x512xf32, #tpu.memory_space<vmem>>, vector<8x512xf32>
    tpu.vector_store %arg4[%c0_3, %c0_4], %11 {strides = array<i32>} : memref<8x512xf32, #tpu.memory_space<vmem>>, vector<8x512xf32>,
    return
  }
  func.func @transform_0(%arg0: i32) -> i32 {
    %c0_i32 = arith.constant 0 : i32
    %c0_i32_0 = arith.constant 0 : i32
    return %c0_i32 : i32
  }
  func.func @transform_1(%arg0: i32) -> i32 {
    %c0_i32 = arith.constant 0 : i32
    %c0_i32_0 = arith.constant 0 : i32
    return %c0_i32 : i32
  }
  func.func @transform_2(%arg0: i32) -> (i32, i32) {
    %c0_i32 = arith.constant 0 : i32
    %c0_i32_0 = arith.constant 0 : i32
    return %arg0, %c0_i32 : i32, i32
  }
  func.func @transform_3(%arg0: i32) -> (i32, i32) {
    %c0_i32 = arith.constant 0 : i32
    %c0_i32_0 = arith.constant 0 : i32
    return %arg0, %c0_i32 : i32, i32
  }
}

</mosaic_0001>

<llo_original>
// kernel: tpu_custom_call.1
$region0: #{tpu_custom_call.1}
  #allocation0 [shape = 'u32[]', space=smem, size = 0x4, offset = 0x4, fixed_abs, tag = 'smem constant byte address 0x4 - core index']
  #allocation1 [shape = 'u32[72,128]{1,0:T(1,128)}', space=vmem, size = 0x9000, scoped, tag = 'internal scratch']
  #allocation2 [shape = 'f32[1]{0:T(128)S(6)}', space=smem, size = 0x200, scoped, tag = 'scoped memory for tpu_custom_call.1']
  %s0 = inlined_call_operand.vmem [shape: f32[2], index: 0, kind: input, shape index: {}]
  %s1 = inlined_call_operand.<no memory space> [shape: f32[1], index: 1, kind: input, shape index: {}]
  %s2 = inlined_call_operand.hbm [shape: f32[1,512], index: 2, kind: input, shape index: {}]
  %s3 = inlined_call_operand.hbm [shape: f32[1,512], index: 3, kind: output, shape index: {}]
  %s4 = sld [smem:[#allocation0]]
  $region30: #{tpu_custom_call.1} parent=0
    _
  %s6 = ssub.s32 1, %s4
  %s7 = scalar_select 0, %s6, %s4
  %8 = sst [smem:[#allocation2]] %s1
  $region1: #{tpu_custom_call.1} parent=0
    #allocation3 [shape = 'u8[512]{0}', space=smem, size = 0x200, scoped, tag = 'input window, operand 0, single buffered']
    #allocation4 [shape = 's32[1]{0}', space=sflag, size = 0x4, scoped, tag = 'scoped memory for tpu_custom_call.1']
    #allocation5 [shape = 's32[1]{0}', space=sflag, size = 0x4, scoped, tag = 'scoped memory for tpu_custom_call.1']
    #allocation6 [shape = 's32[1]{0}', space=sflag, size = 0x4, scoped, tag = 'scoped memory for tpu_custom_call.1']
    #allocation7 [shape = 'u8[16384]{0}', space=vmem, size = 0x4000, scoped, tag = 'input window, operand 2, single buffered']
    #allocation8 [shape = 'u8[16384]{0}', space=vmem, size = 0x4000, scoped, tag = 'output window, operand 0, single buffered']
    %9 = vsyncpa [#allocation6], 0
    %10 = vsyncpa [#allocation4], 0
    %11 = vsyncpa [#allocation5], 0
    // Predicated region
    $region2: #{tpu_custom_call.1} parent=1 // pred_check
      _
    $region3: #{tpu_custom_call.1} parent=1 // pred_check_branch
      %13 = sbr.rel (0) target = $region5
    $region4: #{tpu_custom_call.1} parent=1 // pred_region
      %15 = vsyncadd [#allocation6], 0
      %s17 = sshll.u32 %s0, 4
      %s18 = int_to_ptr.vmem [resolvable:$true] %s17
      %20 = dma.vmem_to_smem %s18, 16, [#allocation3], [#allocation6]
    $region5: #{tpu_custom_call.1} parent=1 // pred_fallthru
      _
    // Predicated region
    $region6: #{tpu_custom_call.1} parent=1 // pred_check
      _
    $region7: #{tpu_custom_call.1} parent=1 // pred_check_branch
      %22 = sbr.rel (0) target = $region9
    $region8: #{tpu_custom_call.1} parent=1 // pred_region
      _
    $region9: #{tpu_custom_call.1} parent=1 // pred_fallthru
      _
    // Predicated region
    $region10: #{tpu_custom_call.1} parent=1 // pred_check
      _
    $region11: #{tpu_custom_call.1} parent=1 // pred_check_branch
      %24 = sbr.rel (0) target = $region13
    $region12: #{tpu_custom_call.1} parent=1 // pred_region
      %26 = vsyncadd [#allocation4], 448
      %s27 = sshll.u32 %s2, 4
      %s28 = int_to_ptr.hbm [resolvable:$true] %s27
      %s29 = sshll.u32 [#allocation7], 4
      %s30 = int_to_ptr.vmem [resolvable:$true] %s29
      %35 = dma.hbm_to_vmem [thread:$0]  %s28, 64, %s30, [#allocation4], 64, 64, 4
    $region13: #{tpu_custom_call.1} parent=1 // pred_fallthru
      _
    // Predicated region
    $region14: #{tpu_custom_call.1} parent=1 // pred_check
      _
    $region15: #{tpu_custom_call.1} parent=1 // pred_check_branch
      %37 = sbr.rel (0) target = $region17
    $region16: #{tpu_custom_call.1} parent=1 // pred_region
      %39 = dma.done [#allocation6], 16
    $region17: #{tpu_custom_call.1} parent=1 // pred_fallthru
      _
    // Predicated region
    $region18: #{tpu_custom_call.1} parent=1 // pred_check
      _
    $region19: #{tpu_custom_call.1} parent=1 // pred_check_branch
      %41 = sbr.rel (0) target = $region21
    $region20: #{tpu_custom_call.1} parent=1 // pred_region
      %43 = dma.done [#allocation4], 512
    $region21: #{tpu_custom_call.1} parent=1 // pred_fallthru
      _
    %44 = sfence
    %v45 = vld [vmem:[#allocation7] sm:$0xf]
    %v46 = vld [vmem:[#allocation7 + $0x4] sm:$0xf]
    %v47 = vld [vmem:[#allocation7 + $0x8] sm:$0xf]
    %v48 = vld [vmem:[#allocation7 + $0xc] sm:$0xf]
    %v49 = vld [vmem:[#allocation7 + $0x10] sm:$0xf]
    %v50 = vld [vmem:[#allocation7 + $0x14] sm:$0xf]
    %v51 = vld [vmem:[#allocation7 + $0x18] sm:$0xf]
    %v52 = vld [vmem:[#allocation7 + $0x1c] sm:$0xf]
    %s53 = sld [smem:[#allocation3 + $0x1]]
    %v54 = vstv %s53
    %v55 = vmul.f32 %v54, %v45
    %v56 = vmul.f32 %v54, %v46
    %v57 = vmul.f32 %v54, %v47
    %v58 = vmul.f32 %v54, %v48
    %v59 = vmul.f32 %v54, %v49
    %v60 = vmul.f32 %v54, %v50
    %v61 = vmul.f32 %v54, %v51
    %v62 = vmul.f32 %v54, %v52
    %s63 = sld [smem:[#allocation3]]
    %v64 = vstv %s63
    %v65 = vadd.f32 %v55, %v64
    %v66 = vadd.f32 %v56, %v64
    %v67 = vadd.f32 %v57, %v64
    %v68 = vadd.f32 %v58, %v64
    %v69 = vadd.f32 %v59, %v64
    %v70 = vadd.f32 %v60, %v64
    %v71 = vadd.f32 %v61, %v64
    %v72 = vadd.f32 %v62, %v64
    %v73 = vmul.f32 %v45, %v45
    %v74 = vmul.f32 %v46, %v46
    %v75 = vmul.f32 %v47, %v47
    %v76 = vmul.f32 %v48, %v48
    %v77 = vmul.f32 %v49, %v49
    %v78 = vmul.f32 %v50, %v50
    %v79 = vmul.f32 %v51, %v51
    %v80 = vmul.f32 %v52, %v52
    %v81 = vmul.f32 %v65, %v73
    %v82 = vmul.f32 %v66, %v74
    %v83 = vmul.f32 %v67, %v75
    %v84 = vmul.f32 %v68, %v76
    %v85 = vmul.f32 %v69, %v77
    %v86 = vmul.f32 %v70, %v78
    %v87 = vmul.f32 %v71, %v79
    %v88 = vmul.f32 %v72, %v80
    %s89 = sld [smem:[#allocation2]]
    %v90 = vstv %s89
    %v91 = vadd.f32 %v81, %v90
    %v92 = vadd.f32 %v82, %v90
    %v93 = vadd.f32 %v83, %v90
    %v94 = vadd.f32 %v84, %v90
    %v95 = vadd.f32 %v85, %v90
    %v96 = vadd.f32 %v86, %v90
    %v97 = vadd.f32 %v87, %v90
    %v98 = vadd.f32 %v88, %v90
    %v99 = vlaneseq
    %vm100 = vcmp.ge.s32.totalorder %v99, 0
    %vm101 = vcmp.lt.s32.totalorder %v99, 512
    %vm102 = vmand %vm100, %vm101
    %103 = vst.msk [vmem:[#allocation8] sm:$0xf] %vm102, %v91
    %104 = vst.msk [vmem:[#allocation8 + $0x4] sm:$0xf] %vm102, %v92
    %105 = vst.msk [vmem:[#allocation8 + $0x8] sm:$0xf] %vm102, %v93
    %106 = vst.msk [vmem:[#allocation8 + $0xc] sm:$0xf] %vm102, %v94
    %107 = vst.msk [vmem:[#allocation8 + $0x10] sm:$0xf] %vm102, %v95
    %108 = vst.msk [vmem:[#allocation8 + $0x14] sm:$0xf] %vm102, %v96
    %109 = vst.msk [vmem:[#allocation8 + $0x18] sm:$0xf] %vm102, %v97
    %110 = vst.msk [vmem:[#allocation8 + $0x1c] sm:$0xf] %vm102, %v98
    // Predicated region
    $region22: #{tpu_custom_call.1} parent=1 // pred_check
      _
    $region23: #{tpu_custom_call.1} parent=1 // pred_check_branch
      %112 = sbr.rel (0) target = $region25
    $region24: #{tpu_custom_call.1} parent=1 // pred_region
      %114 = vsyncadd [#allocation5], 448
      %s115 = sshll.u32 [#allocation8], 4
      %s116 = int_to_ptr.vmem [resolvable:$true] %s115
      %s117 = sshll.u32 %s3, 4
      %s118 = int_to_ptr.hbm [resolvable:$true] %s117
      %123 = dma.vmem_to_hbm [thread:$0]  %s116, 64, %s118, [#allocation5], 64, 64, 4
    $region25: #{tpu_custom_call.1} parent=1 // pred_fallthru
      _
    // Predicated region
    $region26: #{tpu_custom_call.1} parent=1 // pred_check
      _
    $region27: #{tpu_custom_call.1} parent=1 // pred_check_branch
      %125 = sbr.rel (0) target = $region29
    $region28: #{tpu_custom_call.1} parent=1 // pred_region
      %127 = dma.done [#allocation5], 512
    $region29: #{tpu_custom_call.1} parent=1 // pred_fallthru
      _
    %128 = vsyncpa [#allocation4], 1
    %129 = vsyncpa [#allocation5], 1
    %130 = vsyncpa [#allocation6], 1

</llo_original>
